<compile_context>
chip_gen: v7x
topology: tpu7x:2x2x1
jax: 0.10.0
libtpu: 0.0.40
codegen_flags: <defaults>
</compile_context>

<pallas_src>
import jax
import jax.numpy as jnp
from jax.experimental import pallas as pl
from jax.experimental.pallas import tpu as pltpu

_LANE = 128


def _dma_identity_kernel(x_hbm_ref, o_hbm_ref, copy_sem):
    # One whole-array HBM->HBM DMA: no VMEM staging, no grid, no vld/vst work.
    cp = pltpu.make_async_copy(x_hbm_ref, o_hbm_ref, copy_sem)
    cp.start()
    cp.wait()


def _pallas_identity_copy(x: jax.Array) -> jax.Array:
    """Identity via a single HBM->HBM DMA (demonstration kernel path)."""
    total = x.size
    if total == 0:
        return x

    if total % _LANE == 0:
        # Lane-dense 2-D slab; pure metadata for a contiguous row-major array.
        flat = x.reshape(total // _LANE, _LANE)
    else:
        # Flat 1-D byte copy for awkward element counts (no pad/unpad passes).
        flat = x.reshape(total)

    out = pl.pallas_call(
        _dma_identity_kernel,
        out_shape=jax.ShapeDtypeStruct(flat.shape, flat.dtype),
        in_specs=[pl.BlockSpec(memory_space=pl.ANY)],
        out_specs=pl.BlockSpec(memory_space=pl.ANY),
        scratch_shapes=[pltpu.SemaphoreType.DMA],
    )(flat)

    return out.reshape(x.shape)


def model4_forward(x: jax.Array, *, force_kernel: bool = False) -> jax.Array:
    """Pallas equivalent of Model_4.forward (identity).

    Default: zero-byte path — returns the input unchanged for every shape and
    dtype (the optimal identity).  Note this aliases the input array; pass
    force_kernel=True to materialize a fresh output buffer via the DMA kernel.
    """
    if not force_kernel:
        return x
    return _pallas_identity_copy(x)


class Model4:
    """Mirror of the PyTorch Model_4: no parameters, hidden_size unused."""

    def __init__(self, hidden_size: int):
        del hidden_size  # unused in the reference module as well

    def __call__(self, x: jax.Array) -> jax.Array:
        return model4_forward(x)


if __name__ == "__main__":
    key = jax.random.PRNGKey(0)
    # Small NCHW input consistent with a CNN-style module.
    x = jax.random.normal(key, (2, 4, 16, 16), dtype=jnp.float32)

    model = Model4(hidden_size=32)

    # 1) Default (optimal) path: identity with zero bytes moved.
    y_fast = jax.block_until_ready(model(x))
    assert y_fast.shape == x.shape and y_fast.dtype == x.dtype
    assert bool(jnp.allclose(y_fast, x))

    # 2) Kernel path: single HBM->HBM DMA copy (runs the Pallas kernel once).
    y_kernel = jax.block_until_ready(model4_forward(x, force_kernel=True))
    assert y_kernel.shape == x.shape and y_kernel.dtype == x.dtype
    assert bool(jnp.allclose(y_kernel, x))

    # 3) Kernel path with a non-128-divisible shape (flat 1-D DMA fallback).
    x_odd = jax.random.normal(jax.random.PRNGKey(1), (3, 5, 7), dtype=jnp.float32)
    y_odd = jax.block_until_ready(model4_forward(x_odd, force_kernel=True))
    assert y_odd.shape == x_odd.shape and bool(jnp.allclose(y_odd, x_odd))

    # 4) Kernel path with a packed dtype (DMA is dtype-agnostic — no sublane
    #    gating or relayout needed for bf16/int8).
    x_bf16 = jax.random.normal(jax.random.PRNGKey(2), (2, 4, 16, 16)).astype(jnp.bfloat16)
    y_bf16 = jax.block_until_ready(model4_forward(x_bf16, force_kernel=True))
    assert y_bf16.shape == x_bf16.shape and y_bf16.dtype == x_bf16.dtype
    assert bool(jnp.array_equal(y_bf16, x_bf16))

    print("KERNEL_OK")
</pallas_src>

<mosaic_0001>
module attributes {stable_mosaic.version = 11 : i64} {
  func.func @_dma_identity_kernel(%arg0: memref<16x128xf32, #tpu.memory_space<any>>, %arg1: memref<16x128xf32, #tpu.memory_space<any>>, %arg2: memref<!tpu.dma_semaphore, #tpu.memory_space<semaphore_mem>>) attributes {dimension_semantics = [], scalar_prefetch = 0 : i64, scratch_operands = 1 : i64, tpu.core_type = #tpu.core_type<tc>} {
    tpu.enqueue_dma source(%arg0 : memref<16x128xf32, #tpu.memory_space<any>>) target(%arg1 : memref<16x128xf32, #tpu.memory_space<any>>) target_semaphore(%arg2 : memref<!tpu.dma_semaphore, #tpu.memory_space<semaphore_mem>>)
    tpu.wait_dma2 semaphore(%arg2 : memref<!tpu.dma_semaphore, #tpu.memory_space<semaphore_mem>>) src(%arg0 : memref<16x128xf32, #tpu.memory_space<any>>) dst(%arg1 : memref<16x128xf32, #tpu.memory_space<any>>)
    return
  }
}

</mosaic_0001>

<llo_original>
// kernel: tpu_custom_call.1
$region0: #{tpu_custom_call.1}
  #allocation0 [shape = 'u32[]', space=smem, size = 0x4, offset = 0x4, fixed_abs, tag = 'smem constant byte address 0x4 - core index']
  #allocation1 [shape = 'u32[144,128]{1,0:T(1,128)}', space=vmem, size = 0x12000, scoped, tag = 'internal scratch']
  #allocation2 [shape = 's32[1]{0}', space=sflag, size = 0x4, scoped, tag = 'scratch operand']
  #allocation3 [shape = 's32[]', space=sflag, size = 0x4, offset = 0, fixed_abs, tag = 'sflag constant byte address 0x0 - dummy sync flag']
  #allocation4 [shape = 'u32[0]{0}', space=smem, size = 0, offset = 0, fixed_abs, tag = 'smem constant byte address 0x0 - null']
  %s0 = inlined_call_operand.hbm [shape: f32[16,128], index: 0, kind: input, shape index: {}]
  %s1 = inlined_call_operand.hbm [shape: f32[16,128], index: 1, kind: output, shape index: {}]
  %s2 = sld [smem:[#allocation0]]
  $region2: #{tpu_custom_call.1} parent=0
    _
  %s4 = ssub.s32 1, %s2
  %s5 = scalar_select 0, %s4, %s2
  %s7 = sshll.u32 1, 14
  %s8 = sxor.u32 4294967295, %s7
  %s11 = sshll.u32 3, 24
  %s12 = sxor.u32 4294967295, %s11
  %s13 = sand.u32 0, %s12
  %s15 = sor.u32 %s13, 0
  %18 = dma.general %s0, 256, %s1, [#allocation2], [#allocation3], [#allocation4], %s15, 0
  %s19 = smul.u32 16, 1
  %s20 = sshll.u32 %s19, 4
  %21 = dma.done [#allocation2], %s20
  %22 = vsyncmov [#allocation2]
  %s23 = vpop.sfrf %22
  %p24 = scmp.eq.s32.totalorder %s23, 0
  %p25 = pneg %p24
  %27 = shalt.err (%p25)

</llo_original>
